<compile_context>
chip_gen: v7x
topology: tpu7x:2x2x1
jax: 0.10.0
libtpu: 0.0.40
codegen_flags: <defaults>
</compile_context>

<pallas_src>
import functools

import numpy as np
import jax
import jax.numpy as jnp
from jax import lax
from jax.experimental import pallas as pl
from jax.experimental.pallas import tpu as pltpu

KSIZE = 3
PAD = 1


def _make_tap_masks(H, W):
    """(9, H*W) float32 validity masks: mask[tap, y*W+x] == 1 iff the tap's source
    pixel (y+dy-1, x+dx-1) lies inside the image (i.e. not in the zero halo)."""
    HW = H * W
    y = np.arange(HW) // W
    x = np.arange(HW) % W
    masks = np.ones((KSIZE * KSIZE, HW), np.float32)
    for tap in range(KSIZE * KSIZE):
        sy = tap // KSIZE - PAD
        sx = tap % KSIZE - PAD
        valid = (y + sy >= 0) & (y + sy < H) & (x + sx >= 0) & (x + sx < W)
        masks[tap] = valid.astype(np.float32)
    return masks


def _choose_images_per_block(N, Cin, Cout, HW):
    """Largest divisor B of N that still leaves >= 2 grid steps (keeps both v7x
    TensorCores busy) and fits a conservative VMEM budget.  Single-TC chips
    (v5e/v6e) can override with images_per_block=N to collapse the grid."""
    if N <= 1:
        return max(N, 1)
    best = 1
    for b in range(1, N // 2 + 1):
        if N % b != 0 or N // b < 2:
            continue
        in_out_bytes = 2 * b * (Cin + Cout) * HW * 4      # double-buffered x / out blocks
        wm_bytes = 2 * 9 * b * Cin * HW * 4               # resident folded weights
        if in_out_bytes + wm_bytes <= (8 << 20):          # conservative for v5e's 16 MiB scoped VMEM
            best = b
    return best


def _dsconv_kernel(x_ref, wm_ref, wpw_ref, o_ref, *, W):
    # x_ref  : (B*Cin, H*W)       packed images: (image, channel) on sublanes, flat spatial on lanes
    # wm_ref : (9, B*Cin, H*W)    depthwise weights with zero-halo masks pre-folded (tiled over B)
    # wpw_ref: (B*Cout, B*Cin)    block-diagonal pointwise weights
    # o_ref  : (B*Cout, H*W)
    hw = x_ref.shape[-1]
    x = x_ref[...].astype(jnp.float32)

    # Depthwise 3x3: 8 lane rotations (XLU slot) + one multiply per tap (VPU).
    # Masks/weights are pre-folded, so no per-tap mask multiply or weight broadcast.
    terms = []
    for tap in range(KSIZE * KSIZE):
        off = (tap // KSIZE - PAD) * W + (tap % KSIZE - PAD)   # flat-index shift of this tap
        src = x if off == 0 else pltpu.roll(x, (-off) % hw, axis=1)  # src[p] = x[p + off]
        terms.append(src * wm_ref[tap, :, :])
    # Tree add to shorten the VALU dependency chain (vs a 9-deep serial chain).
    while len(terms) > 1:
        nxt = [terms[i] + terms[i + 1] for i in range(0, len(terms) - 1, 2)]
        if len(terms) % 2:
            nxt.append(terms[-1])
        terms = nxt
    acc = terms[0]                                            # (B*Cin, H*W)

    # Pointwise 1x1 on the MXU: VALU/XLU are the binding slots, MXU is idle, and
    # the block-diagonal weight keeps the B packed images independent.
    out = jnp.dot(wpw_ref[...].astype(jnp.float32), acc,
                  preferred_element_type=jnp.float32)         # (B*Cout, H*W)
    o_ref[...] = out.astype(o_ref.dtype)                      # lane-dense, unmasked store


def depthwise_separable_conv(x_nchw, w_dw, w_pw, images_per_block=None):
    """x_nchw: (N, Cin, H, W); w_dw: (Cin, 1, 3, 3); w_pw: (Cout, Cin, 1, 1)."""
    N, Cin, H, W = x_nchw.shape
    Cout = w_pw.shape[0]
    HW = H * W

    B = images_per_block if images_per_block is not None else \
        _choose_images_per_block(N, Cin, Cout, HW)
    assert N % B == 0, "images_per_block must divide the batch size"
    G = N // B

    # Free, contiguous reshape: pack B images per block along the sublane axis.
    x_blk = x_nchw.reshape(G, B * Cin, HW)

    # Fold zero-halo masks into the per-tap depthwise weights, tiled over the B
    # packed images: wm[tap, b*Cin + c, p] = w_dw[c, tap] * mask[tap, p].
    masks = jnp.asarray(_make_tap_masks(H, W))                        # (9, HW)
    wdw = w_dw.reshape(Cin, KSIZE * KSIZE).astype(jnp.float32)        # (Cin, 9)
    wm = wdw.T[:, :, None] * masks[:, None, :]                        # (9, Cin, HW)
    wm = jnp.tile(wm, (1, B, 1))                                      # (9, B*Cin, HW)

    # Block-diagonal pointwise weight so one MXU matmul handles all packed images.
    wpw = w_pw.reshape(Cout, Cin).astype(jnp.float32)
    wpw_blk = jnp.kron(jnp.eye(B, dtype=jnp.float32), wpw)            # (B*Cout, B*Cin)

    kernel = functools.partial(_dsconv_kernel, W=W)

    out_blk = pl.pallas_call(
        kernel,
        out_shape=jax.ShapeDtypeStruct((G, B * Cout, HW), x_nchw.dtype),
        grid_spec=pltpu.PrefetchScalarGridSpec(
            num_scalar_prefetch=0,
            grid=(G,),
            in_specs=[
                pl.BlockSpec((None, B * Cin, HW), lambda n: (n, 0, 0)),
                pl.BlockSpec((KSIZE * KSIZE, B * Cin, HW), lambda n: (0, 0, 0)),
                pl.BlockSpec((B * Cout, B * Cin), lambda n: (0, 0)),
            ],
            out_specs=pl.BlockSpec((None, B * Cout, HW), lambda n: (n, 0, 0)),
        ),
        compiler_params=pltpu.CompilerParams(
            dimension_semantics=("parallel",),
        ),
    )(x_blk, wm, wpw_blk)

    return out_blk.reshape(N, Cout, H, W)                             # free reshape back to NCHW


def _reference(x_nchw, w_dw, w_pw):
    """Pure-JAX reference matching nn.Conv2d semantics (for correctness check)."""
    Cin = x_nchw.shape[1]
    dw = lax.conv_general_dilated(
        x_nchw, w_dw,
        window_strides=(1, 1), padding=((PAD, PAD), (PAD, PAD)),
        dimension_numbers=("NCHW", "OIHW", "NCHW"),
        feature_group_count=Cin,
    )
    pw = lax.conv_general_dilated(
        dw, w_pw,
        window_strides=(1, 1), padding="VALID",
        dimension_numbers=("NCHW", "OIHW", "NCHW"),
    )
    return pw


if __name__ == "__main__":
    key = jax.random.PRNGKey(0)
    k_x, k_dw, k_pw = jax.random.split(key, 3)

    N, Cin, Cout, H, W = 2, 4, 8, 16, 16

    x = jax.random.normal(k_x, (N, Cin, H, W), dtype=jnp.float32)
    # depthwise: Conv2d(nin, nin, 3, padding=1, groups=nin, bias=False) -> (Cin, 1, 3, 3)
    # pointwise: Conv2d(nin, nout, 1, bias=False)                       -> (Cout, Cin, 1, 1)
    w_dw = jax.random.normal(k_dw, (Cin, 1, KSIZE, KSIZE), dtype=jnp.float32) * 0.1
    w_pw = jax.random.normal(k_pw, (Cout, Cin, 1, 1), dtype=jnp.float32) * 0.1

    out = jax.block_until_ready(depthwise_separable_conv(x, w_dw, w_pw))
    ref = jax.block_until_ready(_reference(x, w_dw, w_pw))

    assert out.shape == ref.shape
    assert jnp.allclose(out, ref, atol=1e-4, rtol=1e-4)

    print("KERNEL_OK")
</pallas_src>

<mosaic_0001>
module attributes {stable_mosaic.version = 11 : i64} {
  func.func @_dsconv_kernel(%arg0: i32, %arg1: memref<1x4x256xf32, #tpu.memory_space<vmem>>, %arg2: memref<9x4x256xf32, #tpu.memory_space<vmem>>, %arg3: memref<8x4xf32, #tpu.memory_space<vmem>>, %arg4: memref<1x8x256xf32, #tpu.memory_space<vmem>>) attributes {dimension_semantics = [#tpu.dimension_semantics<parallel>], iteration_bounds = array<i64: 2>, scalar_prefetch = 0 : i64, scratch_operands = 0 : i64, tpu.core_type = #tpu.core_type<tc>, window_params = [{transform_indices = @transform_0, window_bounds = array<i64: 1, 4, 256>}, {pipeline_mode = #tpu.pipeline_mode<synchronous>, transform_indices = @transform_1, window_bounds = array<i64: 9, 4, 256>}, {pipeline_mode = #tpu.pipeline_mode<synchronous>, transform_indices = @transform_2, window_bounds = array<i64: 8, 4>}, {transform_indices = @transform_3, window_bounds = array<i64: 1, 8, 256>}]} {
    %c0 = arith.constant 0 : index
    %c0_0 = arith.constant 0 : index
    %c0_1 = arith.constant 0 : index
    %0 = vector.load %arg1[%c0, %c0_0, %c0_1] : memref<1x4x256xf32, #tpu.memory_space<vmem>>, vector<1x4x256xf32>
    %1 = vector.shape_cast %0 : vector<1x4x256xf32> to vector<4x256xf32>
    %c17_i32 = arith.constant 17 : i32
    %2 = tpu.dynamic_rotate %1 by %c17_i32 dim 1 : vector<4x256xf32>, i32 -> vector<4x256xf32>
    %c0_2 = arith.constant 0 : index
    %c0_3 = arith.constant 0 : index
    %c0_4 = arith.constant 0 : index
    %3 = vector.load %arg2[%c0_2, %c0_3, %c0_4] : memref<9x4x256xf32, #tpu.memory_space<vmem>>, vector<1x4x256xf32>
    %4 = vector.shape_cast %3 : vector<1x4x256xf32> to vector<4x256xf32>
    %5 = arith.mulf %2, %4 : vector<4x256xf32>
    %c16_i32 = arith.constant 16 : i32
    %6 = tpu.dynamic_rotate %1 by %c16_i32 dim 1 : vector<4x256xf32>, i32 -> vector<4x256xf32>
    %c1 = arith.constant 1 : index
    %c0_5 = arith.constant 0 : index
    %c0_6 = arith.constant 0 : index
    %7 = vector.load %arg2[%c1, %c0_5, %c0_6] : memref<9x4x256xf32, #tpu.memory_space<vmem>>, vector<1x4x256xf32>
    %8 = vector.shape_cast %7 : vector<1x4x256xf32> to vector<4x256xf32>
    %9 = arith.mulf %6, %8 : vector<4x256xf32>
    %c15_i32 = arith.constant 15 : i32
    %10 = tpu.dynamic_rotate %1 by %c15_i32 dim 1 : vector<4x256xf32>, i32 -> vector<4x256xf32>
    %c2 = arith.constant 2 : index
    %c0_7 = arith.constant 0 : index
    %c0_8 = arith.constant 0 : index
    %11 = vector.load %arg2[%c2, %c0_7, %c0_8] : memref<9x4x256xf32, #tpu.memory_space<vmem>>, vector<1x4x256xf32>
    %12 = vector.shape_cast %11 : vector<1x4x256xf32> to vector<4x256xf32>
    %13 = arith.mulf %10, %12 : vector<4x256xf32>
    %c1_i32 = arith.constant 1 : i32
    %14 = tpu.dynamic_rotate %1 by %c1_i32 dim 1 : vector<4x256xf32>, i32 -> vector<4x256xf32>
    %c3 = arith.constant 3 : index
    %c0_9 = arith.constant 0 : index
    %c0_10 = arith.constant 0 : index
    %15 = vector.load %arg2[%c3, %c0_9, %c0_10] : memref<9x4x256xf32, #tpu.memory_space<vmem>>, vector<1x4x256xf32>
    %16 = vector.shape_cast %15 : vector<1x4x256xf32> to vector<4x256xf32>
    %17 = arith.mulf %14, %16 : vector<4x256xf32>
    %c4 = arith.constant 4 : index
    %c0_11 = arith.constant 0 : index
    %c0_12 = arith.constant 0 : index
    %18 = vector.load %arg2[%c4, %c0_11, %c0_12] : memref<9x4x256xf32, #tpu.memory_space<vmem>>, vector<1x4x256xf32>
    %19 = vector.shape_cast %18 : vector<1x4x256xf32> to vector<4x256xf32>
    %20 = arith.mulf %1, %19 : vector<4x256xf32>
    %c255_i32 = arith.constant 255 : i32
    %21 = tpu.dynamic_rotate %1 by %c255_i32 dim 1 : vector<4x256xf32>, i32 -> vector<4x256xf32>
    %c5 = arith.constant 5 : index
    %c0_13 = arith.constant 0 : index
    %c0_14 = arith.constant 0 : index
    %22 = vector.load %arg2[%c5, %c0_13, %c0_14] : memref<9x4x256xf32, #tpu.memory_space<vmem>>, vector<1x4x256xf32>
    %23 = vector.shape_cast %22 : vector<1x4x256xf32> to vector<4x256xf32>
    %24 = arith.mulf %21, %23 : vector<4x256xf32>
    %c241_i32 = arith.constant 241 : i32
    %25 = tpu.dynamic_rotate %1 by %c241_i32 dim 1 : vector<4x256xf32>, i32 -> vector<4x256xf32>
    %c6 = arith.constant 6 : index
    %c0_15 = arith.constant 0 : index
    %c0_16 = arith.constant 0 : index
    %26 = vector.load %arg2[%c6, %c0_15, %c0_16] : memref<9x4x256xf32, #tpu.memory_space<vmem>>, vector<1x4x256xf32>
    %27 = vector.shape_cast %26 : vector<1x4x256xf32> to vector<4x256xf32>
    %28 = arith.mulf %25, %27 : vector<4x256xf32>
    %c240_i32 = arith.constant 240 : i32
    %29 = tpu.dynamic_rotate %1 by %c240_i32 dim 1 : vector<4x256xf32>, i32 -> vector<4x256xf32>
    %c7 = arith.constant 7 : index
    %c0_17 = arith.constant 0 : index
    %c0_18 = arith.constant 0 : index
    %30 = vector.load %arg2[%c7, %c0_17, %c0_18] : memref<9x4x256xf32, #tpu.memory_space<vmem>>, vector<1x4x256xf32>
    %31 = vector.shape_cast %30 : vector<1x4x256xf32> to vector<4x256xf32>
    %32 = arith.mulf %29, %31 : vector<4x256xf32>
    %c239_i32 = arith.constant 239 : i32
    %33 = tpu.dynamic_rotate %1 by %c239_i32 dim 1 : vector<4x256xf32>, i32 -> vector<4x256xf32>
    %c8 = arith.constant 8 : index
    %c0_19 = arith.constant 0 : index
    %c0_20 = arith.constant 0 : index
    %34 = vector.load %arg2[%c8, %c0_19, %c0_20] : memref<9x4x256xf32, #tpu.memory_space<vmem>>, vector<1x4x256xf32>
    %35 = vector.shape_cast %34 : vector<1x4x256xf32> to vector<4x256xf32>
    %36 = arith.mulf %33, %35 : vector<4x256xf32>
    %37 = arith.addf %5, %9 : vector<4x256xf32>
    %38 = arith.addf %13, %17 : vector<4x256xf32>
    %39 = arith.addf %20, %24 : vector<4x256xf32>
    %40 = arith.addf %28, %32 : vector<4x256xf32>
    %41 = arith.addf %37, %38 : vector<4x256xf32>
    %42 = arith.addf %39, %40 : vector<4x256xf32>
    %43 = arith.addf %41, %42 : vector<4x256xf32>
    %44 = arith.addf %43, %36 : vector<4x256xf32>
    %c0_21 = arith.constant 0 : index
    %c0_22 = arith.constant 0 : index
    %45 = vector.load %arg3[%c0_21, %c0_22] : memref<8x4xf32, #tpu.memory_space<vmem>>, vector<8x4xf32>
    %cst = arith.constant dense<0.000000e+00> : vector<8x256xf32>
    %46 = tpu.matmul %45, %44, %cst {dimension_numbers = #tpu.dot_dimension_numbers<[1], [0], [0], [1], [0, 0, 1, 1], [], []>} : vector<8x4xf32>, vector<4x256xf32>, vector<8x256xf32> -> vector<8x256xf32>
    %c0_23 = arith.constant 0 : index
    %c0_24 = arith.constant 0 : index
    %c0_25 = arith.constant 0 : index
    %47 = vector.load %arg4[%c0_23, %c0_24, %c0_25] : memref<1x8x256xf32, #tpu.memory_space<vmem>>, vector<1x8x256xf32>
    %48 = vector.shape_cast %47 : vector<1x8x256xf32> to vector<8x256xf32>
    %49 = vector.shape_cast %46 : vector<8x256xf32> to vector<1x8x256xf32>
    tpu.vector_store %arg4[%c0_23, %c0_24, %c0_25], %49 {strides = array<i32>} : memref<1x8x256xf32, #tpu.memory_space<vmem>>, vector<1x8x256xf32>,
    return
  }
  func.func @transform_0(%arg0: i32) -> (i32, i32, i32) {
    %c0_i32 = arith.constant 0 : i32
    %c0_i32_0 = arith.constant 0 : i32
    %c0_i32_1 = arith.constant 0 : i32
    return %arg0, %c0_i32, %c0_i32_0 : i32, i32, i32
  }
  func.func @transform_1(%arg0: i32) -> (i32, i32, i32) {
    %c0_i32 = arith.constant 0 : i32
    %c0_i32_0 = arith.constant 0 : i32
    %c0_i32_1 = arith.constant 0 : i32
    %c0_i32_2 = arith.constant 0 : i32
    return %c0_i32, %c0_i32_0, %c0_i32_1 : i32, i32, i32
  }
  func.func @transform_2(%arg0: i32) -> (i32, i32) {
    %c0_i32 = arith.constant 0 : i32
    %c0_i32_0 = arith.constant 0 : i32
    %c0_i32_1 = arith.constant 0 : i32
    return %c0_i32, %c0_i32_0 : i32, i32
  }
  func.func @transform_3(%arg0: i32) -> (i32, i32, i32) {
    %c0_i32 = arith.constant 0 : i32
    %c0_i32_0 = arith.constant 0 : i32
    %c0_i32_1 = arith.constant 0 : i32
    return %arg0, %c0_i32, %c0_i32_0 : i32, i32, i32
  }
}

</mosaic_0001>

<llo_original>
// kernel: tpu_custom_call.1
$region0: #{tpu_custom_call.1}
  #allocation0 [shape = 'u32[]', space=smem, size = 0x4, offset = 0x4, fixed_abs, tag = 'smem constant byte address 0x4 - core index']
  #allocation1 [shape = 'u32[144,128]{1,0:T(1,128)}', space=vmem, size = 0x12000, scoped, tag = 'internal scratch']
  %s0 = inlined_call_operand.hbm [shape: f32[2,4,256], index: 0, kind: input, shape index: {}]
  %s1 = inlined_call_operand.hbm [shape: f32[9,4,256], index: 1, kind: input, shape index: {}]
  %s2 = inlined_call_operand.vmem [shape: f32[8,4], index: 2, kind: input, shape index: {}]
  %s3 = inlined_call_operand.hbm [shape: f32[2,8,256], index: 3, kind: output, shape index: {}]
  %s4 = sld [smem:[#allocation0]]
  $region53: #{tpu_custom_call.1} parent=0
    _
  %s6 = ssub.s32 1, %s4
  %s7 = scalar_select 0, %s6, %s4
  $region1: #{tpu_custom_call.1} parent=0
    #allocation2 [shape = 'u8[8192]{0}', space=vmem, size = 0x2000, scoped, tag = 'input window, operand 0']
    #allocation3 [shape = 's32[2]{0}', space=sflag, size = 0x8, scoped, tag = 'scoped memory for tpu_custom_call.1']
    #allocation4 [shape = 's32[2]{0}', space=sflag, size = 0x8, scoped, tag = 'scoped memory for tpu_custom_call.1']
    #allocation5 [shape = 'u8[36864]{0}', space=vmem, size = 0x9000, scoped, tag = 'input window, operand 1, single buffered']
    #allocation6 [shape = 's32[1]{0}', space=sflag, size = 0x4, scoped, tag = 'scoped memory for tpu_custom_call.1']
    #allocation7 [shape = 'u8[16384]{0}', space=vmem, size = 0x4000, scoped, tag = 'output window, operand 0']
    %8 = vsyncpa [#allocation3], 0
    %s9 = scalar_lea.sflag [#allocation3], 1
    %10 = vsyncpa %s9, 0
    %11 = vsyncpa [#allocation6], 0
    %12 = vsyncpa [#allocation4], 0
    %s13 = scalar_lea.sflag [#allocation4], 1
    %14 = vsyncpa %s13, 0
    loop: start=0, step=1, limit=4
    $region2: #{tpu_custom_call.1} parent=1 // loop_pre_header
      _
    $region3: #{tpu_custom_call.1} parent=1 // loop_header
      %s16 = sphi 0, %s20
      %p17 = scmp.ge.s32.totalorder %s16, 4
      %s26 = sphi 0, %s28
      %s29 = sphi 0, %s26
      %s30 = sphi 0, %s29
      %s46 = sphi 0, %s30
      %s50 = sphi 0, %s50
      %s52 = sphi 0, %s50
      %s53 = sphi 0, %s52
      %s67 = sphi 0, %s53
      %s71 = sphi 0, %s71
      %s73 = sphi 0, %s71
      %s74 = sphi 0, %s73
      %s88 = sphi 0, %s74
      %s94 = sphi 0, %s96
      %s97 = sphi 0, %s94
      %s98 = sphi 0, %s97
      %s114 = sphi 0, %s98
    $region4: #{tpu_custom_call.1} parent=1 // loop_header_branch
      %19 = sbr.rel (%p17) target = $region8
    $region5: #{tpu_custom_call.1} parent=1 // loop_body
      %s21 = ssub.s32 %s16, 1
      %s22 = ssub.s32 %s16, 2
      %s23 = sadd.s32 %s16, 1
      %s24 = ssub.s32 %s16, %s23
      %p25 = scmp.eq.s32.totalorder %s24, 0
      %s27 = sadd.s32 %s26, 1
      %s28 = scalar_select %p25, %s26, %s27
      %p31 = pneg %p25
      %p32 = scmp.eq.s32.totalorder %s16, 1
      %p33 = por %p31, %p32
      %p34 = scmp.ne.s32.totalorder %s26, %s29
      %p35 = scmp.eq.s32.totalorder %s16, 0
      %p36 = por %p34, %p35
      %p37 = scmp.ne.s32.totalorder %s26, %s29
      %p38 = scmp.eq.s32.totalorder %s21, 1
      %p39 = por %p37, %p38
      %p40 = scmp.ne.s32.totalorder %s29, %s30
      %p41 = scmp.eq.s32.totalorder %s21, 0
      %p42 = por %p40, %p41
      %p43 = scmp.ne.s32.totalorder %s29, %s30
      %p44 = scmp.eq.s32.totalorder %s22, 1
      %p45 = por %p43, %p44
      %p47 = scmp.ne.s32.totalorder %s30, %s46
      %p48 = scmp.eq.s32.totalorder %s22, 0
      %p49 = por %p47, %p48
      %s51 = sadd.s32 %s50, 1
      %p54 = scmp.eq.s32.totalorder %s16, 1
      %p55 = scmp.ne.s32.totalorder %s50, %s52
      %p56 = scmp.eq.s32.totalorder %s16, 0
      %p57 = por %p55, %p56
      %p58 = scmp.ne.s32.totalorder %s50, %s52
      %p59 = scmp.eq.s32.totalorder %s21, 1
      %p60 = por %p58, %p59
      %p61 = scmp.ne.s32.totalorder %s52, %s53
      %p62 = scmp.eq.s32.totalorder %s21, 0
      %p63 = por %p61, %p62
      %p64 = scmp.ne.s32.totalorder %s52, %s53
      %p65 = scmp.eq.s32.totalorder %s22, 1
      %p66 = por %p64, %p65
      %p68 = scmp.ne.s32.totalorder %s53, %s67
      %p69 = scmp.eq.s32.totalorder %s22, 0
      %p70 = por %p68, %p69
      %s72 = sadd.s32 %s71, 1
      %p75 = scmp.eq.s32.totalorder %s16, 1
      %p76 = scmp.ne.s32.totalorder %s71, %s73
      %p77 = scmp.eq.s32.totalorder %s16, 0
      %p78 = por %p76, %p77
      %p79 = scmp.ne.s32.totalorder %s71, %s73
      %p80 = scmp.eq.s32.totalorder %s21, 1
      %p81 = por %p79, %p80
      %p82 = scmp.ne.s32.totalorder %s73, %s74
      %p83 = scmp.eq.s32.totalorder %s21, 0
      %p84 = por %p82, %p83
      %p85 = scmp.ne.s32.totalorder %s73, %s74
      %p86 = scmp.eq.s32.totalorder %s22, 1
      %p87 = por %p85, %p86
      %p89 = scmp.ne.s32.totalorder %s74, %s88
      %p90 = scmp.eq.s32.totalorder %s22, 0
      %p91 = por %p89, %p90
      %s92 = ssub.s32 %s16, %s23
      %p93 = scmp.eq.s32.totalorder %s92, 0
      %s95 = sadd.s32 %s94, 1
      %s96 = scalar_select %p93, %s94, %s95
      %p99 = pneg %p93
      %p100 = scmp.eq.s32.totalorder %s16, 1
      %p101 = por %p99, %p100
      %p102 = scmp.ne.s32.totalorder %s94, %s97
      %p103 = scmp.eq.s32.totalorder %s16, 0
      %p104 = por %p102, %p103
      %p105 = scmp.ne.s32.totalorder %s94, %s97
      %p106 = scmp.eq.s32.totalorder %s21, 1
      %p107 = por %p105, %p106
      %p108 = scmp.ne.s32.totalorder %s97, %s98
      %p109 = scmp.eq.s32.totalorder %s21, 0
      %p110 = por %p108, %p109
      %p111 = scmp.ne.s32.totalorder %s97, %s98
      %p112 = scmp.eq.s32.totalorder %s22, 1
      %p113 = por %p111, %p112
      %p115 = scmp.ne.s32.totalorder %s98, %s114
      %p116 = scmp.eq.s32.totalorder %s22, 0
      %p117 = por %p115, %p116
      %p118 = scmp.le.s32.totalorder 1, %s16
      %p119 = scmp.lt.s32.totalorder %s16, 3
      %p120 = pnand %p118, %p119
      %p121 = pneg %p120
      // Predicated region
      $region9: #{tpu_custom_call.1} parent=5 // pred_check
        _
      $region10: #{tpu_custom_call.1} parent=5 // pred_check_branch
        %123 = sbr.rel (%p120) target = $region12
      $region11: #{tpu_custom_call.1} parent=5 // pred_region
        %s124 = ssub.s32 %s16, 1
        // Predicated region
        $region13: #{tpu_custom_call.1} parent=11 // pred_check
          %p125 = pneg %p63
        $region14: #{tpu_custom_call.1} parent=11 // pred_check_branch
          %127 = sbr.rel (%p125) target = $region16
        $region15: #{tpu_custom_call.1} parent=11 // pred_region
          %s129 = ssub.s32 1152, 1152
          %130 = vsyncadd [#allocation6], %s129
          %s131 = sshll.u32 [#allocation5], 4
          %s132 = int_to_ptr.vmem [resolvable:$true] %s131
          %137 = dma.hbm_to_vmem [thread:$0]  %s1, 1152, %s132, [#allocation6], 128, 128, 8
        $region16: #{tpu_custom_call.1} parent=11 // pred_fallthru
          _
        // Predicated region
        $region17: #{tpu_custom_call.1} parent=11 // pred_check
          %p138 = pneg %p84
        $region18: #{tpu_custom_call.1} parent=11 // pred_check_branch
          %140 = sbr.rel (%p138) target = $region20
        $region19: #{tpu_custom_call.1} parent=11 // pred_region
          _
        $region20: #{tpu_custom_call.1} parent=11 // pred_fallthru
          _
      $region12: #{tpu_custom_call.1} parent=5 // pred_fallthru
        _
      %p141 = scmp.lt.s32.totalorder %s16, 2
      // Predicated region
      $region21: #{tpu_custom_call.1} parent=5 // pred_check
        %p142 = pneg %p141
      $region22: #{tpu_custom_call.1} parent=5 // pred_check_branch
        %144 = sbr.rel (%p142) target = $region24
      $region23: #{tpu_custom_call.1} parent=5 // pred_region
        // Predicated region
        $region25: #{tpu_custom_call.1} parent=23 // pred_check
          %p145 = pneg %p36
        $region26: #{tpu_custom_call.1} parent=23 // pred_check_branch
          %147 = sbr.rel (%p145) target = $region28
        $region27: #{tpu_custom_call.1} parent=23 // pred_region
          %s148 = sand.u32 %s26, 1
          %s149 = scalar_lea.sflag [#allocation3], %s148
          %s150 = sand.u32 %s26, 1
          %s151 = smul.addr %s150, 8
          %s152 = scalar_lea.vmem [#allocation2], %s151
          %s154 = ssub.s32 128, 128
          %155 = vsyncadd %s149, %s154
          %s156 = smul.addr %s16, 2
          %s157 = smul.addr %s156, 64
          %s158 = scalar_lea.hbm %s0, %s157
          %s160 = sshll.u32 %s152, 4
          %s161 = int_to_ptr.vmem [resolvable:$true] %s160
          %163 = dma.hbm_to_vmem [thread:$0]  %s158, 128, %s161, %s149
        $region28: #{tpu_custom_call.1} parent=23 // pred_fallthru
          _
      $region24: #{tpu_custom_call.1} parent=5 // pred_fallthru
        _
      %p164 = scmp.le.s32.totalorder 1, %s16
      %p165 = scmp.lt.s32.totalorder %s16, 3
      %p166 = pnand %p164, %p165
      %p167 = pneg %p166
      // Predicated region
      $region29: #{tpu_custom_call.1} parent=5 // pred_check
        _
      $region30: #{tpu_custom_call.1} parent=5 // pred_check_branch
        %169 = sbr.rel (%p166) target = $region32
      $region31: #{tpu_custom_call.1} parent=5 // pred_region
        %s170 = ssub.s32 %s16, 1
        %s171 = sand.u32 %s29, 1
        %s172 = scalar_lea.sflag [#allocation3], %s171
        %s173 = sand.u32 %s29, 1
        %s174 = smul.addr %s173, 8
        %s175 = scalar_lea.vmem [#allocation2], %s174
        // Predicated region
        $region33: #{tpu_custom_call.1} parent=31 // pred_check
          %p176 = pneg %p42
        $region34: #{tpu_custom_call.1} parent=31 // pred_check_branch
          %178 = sbr.rel (%p176) target = $region36
        $region35: #{tpu_custom_call.1} parent=31 // pred_region
          %179 = dma.done %s172, 128
        $region36: #{tpu_custom_call.1} parent=31 // pred_fallthru
          _
        // Predicated region
        $region37: #{tpu_custom_call.1} parent=31 // pred_check
          %p180 = pneg %p63
        $region38: #{tpu_custom_call.1} parent=31 // pred_check_branch
          %182 = sbr.rel (%p180) target = $region40
        $region39: #{tpu_custom_call.1} parent=31 // pred_region
          %183 = dma.done [#allocation6], 1152
        $region40: #{tpu_custom_call.1} parent=31 // pred_fallthru
          _
        %s184 = sand.u32 %s29, 1
        %s185 = scalar_lea.sflag [#allocation3], %s184
        %s186 = sand.u32 %s29, 1
        %s187 = smul.addr %s186, 8
        %s188 = scalar_lea.vmem [#allocation2], %s187
        %p189 = pneg %p42
        %p190 = pneg %p39
        %p191 = pneg %p63
        %p192 = pneg %p60
        %p193 = pneg %p84
        %p194 = pneg %p81
        %p195 = pneg %p110
        %p196 = pneg %p107
        %s197 = sand.u32 %s97, 1
        %s198 = scalar_lea.sflag [#allocation4], %s197
        %s199 = sand.u32 %s97, 1
        %s200 = smul.addr %s199, 16
        %s201 = scalar_lea.vmem [#allocation7], %s200
        %v202 = vld [vmem:[%s175] sm:$0xff]
        %v204 = vcombine.high %v202, %v202
        %206 = vrot.lane.b32.xlu0 %v202, 17
        %v207 = vpop.permute.xlu0 %206
        %208 = vrot.lane.b32.xlu0 %v204, 17
        %v209 = vpop.permute.xlu0 %208
        %v210 = vlaneseq
        %v211 = vand.u32 %v210, 127
        %vm212 = vcmp.lt.s32.totalorder %v211, 17
        %v213 = vsel %vm212, %v207, %v209
        %v214 = vsel %vm212, %v209, %v207
        %v215 = vld [vmem:[#allocation5] sm:$0xff]
        %v217 = vcombine.high %v215, %v215
        %v219 = vmul.f32 %v214, %v215
        %v220 = vmul.f32 %v213, %v217
        %221 = vrot.lane.b32.xlu0 %v202, 16
        %v222 = vpop.permute.xlu0 %221
        %223 = vrot.lane.b32.xlu0 %v204, 16
        %v224 = vpop.permute.xlu0 %223
        %vm225 = vcmp.lt.s32.totalorder %v211, 16
        %v226 = vsel %vm225, %v222, %v224
        %v227 = vsel %vm225, %v224, %v222
        %s228 = scalar_lea.vmem [#allocation5], 8
        %v229 = vld [vmem:[%s228] sm:$0xff]
        %v231 = vcombine.high %v229, %v229
        %v233 = vmul.f32 %v227, %v229
        %v234 = vmul.f32 %v226, %v231
        %235 = vrot.lane.b32.xlu0 %v202, 15
        %v236 = vpop.permute.xlu0 %235
        %237 = vrot.lane.b32.xlu0 %v204, 15
        %v238 = vpop.permute.xlu0 %237
        %vm239 = vcmp.lt.s32.totalorder %v211, 15
        %v240 = vsel %vm239, %v236, %v238
        %v241 = vsel %vm239, %v238, %v236
        %s242 = scalar_lea.vmem [#allocation5], 16
        %v243 = vld [vmem:[%s242] sm:$0xff]
        %v245 = vcombine.high %v243, %v243
        %v247 = vmul.f32 %v241, %v243
        %v248 = vmul.f32 %v240, %v245
        %249 = vrot.lane.b32.xlu0 %v202, 1
        %v250 = vpop.permute.xlu0 %249
        %251 = vrot.lane.b32.xlu0 %v204, 1
        %v252 = vpop.permute.xlu0 %251
        %vm253 = vcmp.lt.s32.totalorder %v211, 1
        %v254 = vsel %vm253, %v250, %v252
        %v255 = vsel %vm253, %v252, %v250
        %s256 = scalar_lea.vmem [#allocation5], 24
        %v257 = vld [vmem:[%s256] sm:$0xff]
        %v259 = vcombine.high %v257, %v257
        %v261 = vmul.f32 %v255, %v257
        %v262 = vmul.f32 %v254, %v259
        %s263 = scalar_lea.vmem [#allocation5], 32
        %v264 = vld [vmem:[%s263] sm:$0xff]
        %v265 = vmul.f32 %v202, %v264
        %266 = vrot.lane.b32.xlu0 %v202, 127
        %v267 = vpop.permute.xlu0 %266
        %268 = vrot.lane.b32.xlu0 %v204, 127
        %v269 = vpop.permute.xlu0 %268
        %vm270 = vcmp.lt.s32.totalorder %v211, 127
        %v271 = vsel %vm270, %v267, %v269
        %v272 = vsel %vm270, %v269, %v267
        %s273 = scalar_lea.vmem [#allocation5], 40
        %v274 = vld [vmem:[%s273] sm:$0xff]
        %v276 = vcombine.high %v274, %v274
        %v278 = vmul.f32 %v271, %v274
        %v279 = vmul.f32 %v272, %v276
        %280 = vrot.lane.b32.xlu0 %v202, 113
        %v281 = vpop.permute.xlu0 %280
        %282 = vrot.lane.b32.xlu0 %v204, 113
        %v283 = vpop.permute.xlu0 %282
        %vm284 = vcmp.lt.s32.totalorder %v211, 113
        %v285 = vsel %vm284, %v281, %v283
        %v286 = vsel %vm284, %v283, %v281
        %s287 = scalar_lea.vmem [#allocation5], 48
        %v288 = vld [vmem:[%s287] sm:$0xff]
        %v290 = vcombine.high %v288, %v288
        %v292 = vmul.f32 %v285, %v288
        %v293 = vmul.f32 %v286, %v290
        %294 = vrot.lane.b32.xlu0 %v202, 112
        %v295 = vpop.permute.xlu0 %294
        %296 = vrot.lane.b32.xlu0 %v204, 112
        %v297 = vpop.permute.xlu0 %296
        %vm298 = vcmp.lt.s32.totalorder %v211, 112
        %v299 = vsel %vm298, %v295, %v297
        %v300 = vsel %vm298, %v297, %v295
        %s301 = scalar_lea.vmem [#allocation5], 56
        %v302 = vld [vmem:[%s301] sm:$0xff]
        %v304 = vcombine.high %v302, %v302
        %v306 = vmul.f32 %v299, %v302
        %v307 = vmul.f32 %v300, %v304
        %308 = vrot.lane.b32.xlu0 %v202, 111
        %v309 = vpop.permute.xlu0 %308
        %310 = vrot.lane.b32.xlu0 %v204, 111
        %v311 = vpop.permute.xlu0 %310
        %vm312 = vcmp.lt.s32.totalorder %v211, 111
        %v313 = vsel %vm312, %v309, %v311
        %v314 = vsel %vm312, %v311, %v309
        %s315 = scalar_lea.vmem [#allocation5], 64
        %v316 = vld [vmem:[%s315] sm:$0xff]
        %v318 = vcombine.high %v316, %v316
        %v320 = vmul.f32 %v313, %v316
        %v321 = vmul.f32 %v314, %v318
        %v322 = vadd.f32 %v219, %v233
        %v323 = vadd.f32 %v220, %v234
        %v324 = vadd.f32 %v247, %v261
        %v325 = vadd.f32 %v248, %v262
        %v328 = vcombine.low %v278, %v279
        %v330 = vadd.f32 %v265, %v328
        %v331 = vadd.f32 %v292, %v306
        %v332 = vadd.f32 %v293, %v307
        %v333 = vadd.f32 %v322, %v324
        %v334 = vadd.f32 %v323, %v325
        %v337 = vcombine.low %v331, %v332
        %v339 = vadd.f32 %v330, %v337
        %v341 = vcombine.high %v339, %v339
        %v343 = vadd.f32 %v333, %v339
        %v344 = vadd.f32 %v334, %v341
        %v345 = vadd.f32 %v343, %v320
        %v346 = vadd.f32 %v344, %v321
        %v347 = vld [vmem:[%s2] sm:$0xff]
        %vm348 = vcmask 31744
        %v350 = vsel %vm348, %v347, 0
        %vm352 = vcmask 1043456
        %v354 = vsel %vm352, %v345, 0
        %v357 = vsel %vm352, %v346, 0
        %359 = vmatprep.subr.mxu0 %v357
        %360 = vmatpush1.msra.mxu0 %v354
        %361 = vmatprep.subr.mxu0 0.0
        %362 = vmatpush1.msra.mxu0 0.0
        %363 = vmatprep.subr.mxu0 0.0
        %364 = vmatpush1.msra.mxu0 0.0
        %365 = vmatprep.subr.mxu0 0.0
        %366 = vmatpush1.msra.mxu0 0.0
        %367 = vmatprep.subr.mxu0 0.0
        %368 = vmatpush1.msra.mxu0 0.0
        %369 = vmatprep.subr.mxu0 0.0
        %370 = vmatpush1.msra.mxu0 0.0
        %371 = vmatprep.subr.mxu0 0.0
        %372 = vmatpush1.msra.mxu0 0.0
        %373 = vmatprep.subr.mxu0 0.0
        %374 = vmatpush1.msra.mxu0 0.0
        %375 = vmatprep.subr.mxu0 0.0
        %376 = vmatpush1.msra.mxu0 0.0
        %377 = vmatprep.subr.mxu0 0.0
        %378 = vmatpush1.msra.mxu0 0.0
        %379 = vmatprep.subr.mxu0 0.0
        %380 = vmatpush1.msra.mxu0 0.0
        %381 = vmatprep.subr.mxu0 0.0
        %382 = vmatpush1.msra.mxu0 0.0
        %383 = vmatprep.subr.mxu0 0.0
        %384 = vmatpush1.msra.mxu0 0.0
        %385 = vmatprep.subr.mxu0 0.0
        %386 = vmatpush1.msra.mxu0 0.0
        %387 = vmatprep.subr.mxu0 0.0
        %388 = vmatpush1.msra.mxu0 0.0
        %389 = vmatprep.subr.mxu0 0.0
        %390 = vmatpush1.msra.mxu0 0.0
        %391 = vmatprep.subr.mxu0 0.0
        %392 = vmatpush1.msra.mxu0 0.0
        %393 = vmatprep.subr.mxu0 0.0
        %394 = vmatpush1.msra.mxu0 0.0
        %395 = vmatprep.subr.mxu0 0.0
        %396 = vmatpush1.msra.mxu0 0.0
        %397 = vmatprep.subr.mxu0 0.0
        %398 = vmatpush1.msra.mxu0 0.0
        %399 = vmatprep.subr.mxu0 0.0
        %400 = vmatpush1.msra.mxu0 0.0
        %401 = vmatprep.subr.mxu0 0.0
        %402 = vmatpush1.msra.mxu0 0.0
        %403 = vmatprep.subr.mxu0 0.0
        %404 = vmatpush1.msra.mxu0 0.0
        %405 = vmatprep.subr.mxu0 0.0
        %406 = vmatpush1.msra.mxu0 0.0
        %407 = vmatprep.subr.mxu0 0.0
        %408 = vmatpush1.msra.mxu0 0.0
        %409 = vmatprep.subr.mxu0 0.0
        %410 = vmatpush1.msra.mxu0 0.0
        %411 = vmatprep.subr.mxu0 0.0
        %412 = vmatpush1.msra.mxu0 0.0
        %413 = vmatprep.subr.mxu0 0.0
        %414 = vmatpush1.msra.mxu0 0.0
        %415 = vmatprep.subr.mxu0 0.0
        %416 = vmatpush1.msra.mxu0 0.0
        %417 = vmatprep.subr.mxu0 0.0
        %418 = vmatpush1.msra.mxu0 0.0
        %419 = vmatprep.subr.mxu0 0.0
        %420 = vmatpush1.msra.mxu0 0.0
        %421 = vmatprep.subr.mxu0 0.0
        %422 = vmatpush1.msra.mxu0 0.0
        %423 = vmatprep.mubr.f32.mxu0 0.0
        %424 = vmatmul.mubr.f32.gmra.mrb[0].mxu0 %v350
        %v425 = vpop.f32.mrb[0].mxu0
        %v426 = vadd.f32 0.0, %v425
        %v427 = vpop.f32.mrb[0].mxu0
        %v428 = vadd.f32 0.0, %v427
        %429 = vdwg.mxu0
        %430 = vst [vmem:[%s201] sm:$0xff] %v426
        %431 = vst [vmem:[%s201 + $0x8] sm:$0xff] %v428
        %s432 = sand.u32 %s97, 1
        %s433 = scalar_lea.sflag [#allocation4], %s432
        %s434 = sand.u32 %s97, 1
        %s435 = smul.addr %s434, 16
        %s436 = scalar_lea.vmem [#allocation7], %s435
        // Predicated region
        $region41: #{tpu_custom_call.1} parent=31 // pred_check
          %p437 = pneg %p107
        $region42: #{tpu_custom_call.1} parent=31 // pred_check_branch
          %439 = sbr.rel (%p437) target = $region44
        $region43: #{tpu_custom_call.1} parent=31 // pred_region
          %s441 = ssub.s32 256, 256
          %442 = vsyncadd %s433, %s441
          %s443 = smul.addr %s21, 2
          %s444 = smul.addr %s443, 128
          %s445 = scalar_lea.hbm %s3, %s444
          %s447 = sshll.u32 %s436, 4
          %s448 = int_to_ptr.vmem [resolvable:$true] %s447
          %450 = dma.vmem_to_hbm [thread:$0]  %s448, 256, %s445, %s433
        $region44: #{tpu_custom_call.1} parent=31 // pred_fallthru
          _
      $region32: #{tpu_custom_call.1} parent=5 // pred_fallthru
        _
      %p451 = scmp.le.s32.totalorder 2, %s16
      // Predicated region
      $region45: #{tpu_custom_call.1} parent=5 // pred_check
        %p452 = pneg %p451
      $region46: #{tpu_custom_call.1} parent=5 // pred_check_branch
        %454 = sbr.rel (%p452) target = $region48
      $region47: #{tpu_custom_call.1} parent=5 // pred_region
        %s455 = ssub.s32 %s16, 2
        // Predicated region
        $region49: #{tpu_custom_call.1} parent=47 // pred_check
          %p456 = pneg %p113
        $region50: #{tpu_custom_call.1} parent=47 // pred_check_branch
          %458 = sbr.rel (%p456) target = $region52
        $region51: #{tpu_custom_call.1} parent=47 // pred_region
          %s459 = sand.u32 %s98, 1
          %s460 = scalar_lea.sflag [#allocation4], %s459
          %s461 = sand.u32 %s98, 1
          %s462 = smul.addr %s461, 16
          %s463 = scalar_lea.vmem [#allocation7], %s462
          %464 = dma.done %s460, 256
        $region52: #{tpu_custom_call.1} parent=47 // pred_fallthru
          _
      $region48: #{tpu_custom_call.1} parent=5 // pred_fallthru
        _
    $region6: #{tpu_custom_call.1} parent=1 // loop_footer
      %s20 = sadd.s32 1, %s16
    $region7: #{tpu_custom_call.1} parent=1 // loop_footer_branch
      %15 = sbr.rel target = $region3
    $region8: #{tpu_custom_call.1} parent=1 // loop_exit
      _
    %465 = vsyncpa [#allocation3], 1
    %s466 = scalar_lea.sflag [#allocation3], 1
    %467 = vsyncpa %s466, 1
    %468 = vsyncpa [#allocation6], 1
    %469 = vsyncpa [#allocation4], 1
    %s470 = scalar_lea.sflag [#allocation4], 1
    %471 = vsyncpa %s470, 1

</llo_original>
